<compile_context>
chip_gen: v5e
topology: v5e:2x2
jax: 0.10.0
libtpu: 0.0.40
codegen_flags: <defaults>
</compile_context>

<pallas_src>
import functools

import jax
import jax.numpy as jnp
import numpy as np
from jax.experimental import pallas as pl
from jax.experimental.pallas import tpu as pltpu


def _round_up(x, m):
    return ((x + m - 1) // m) * m


def _cond_entropy_kernel(x_ref, out_ref, *, n_rows, tm):
    """One anchor-row tile: (-1/B) * sum over valid rows of sum_c p*log p."""
    i = pl.program_id(0)

    x = x_ref[...].astype(jnp.float32)                          # [tm, C], f32 math

    # Numerically stable softmax pieces.
    row_max = jnp.max(x, axis=1, keepdims=True)                 # [tm, 1]  (XLU)
    shifted = x - row_max                                       # [tm, C]
    e = jnp.exp(shifted)                                        # EUP
    z = jnp.sum(e, axis=1, keepdims=True)                       # [tm, 1]  (XLU)

    # 1/Z on the EUP (approx), polished with one Newton step on a [tm,1] vreg.
    inv_z = pl.reciprocal(z, approx=True)
    inv_z = inv_z * (2.0 - z * inv_z)

    # sum_c p*log p = (1/Z) * sum_c e_c * shifted_c - log Z
    s1 = jnp.sum(e * shifted, axis=1, keepdims=True)            # [tm, 1]
    ent = s1 * inv_z - jnp.log(z)                               # [tm, 1]

    scale = jnp.float32(-1.0 / n_rows)                          # fold negation + mean

    def _write(rows):
        out_ref[...] = jnp.broadcast_to(jnp.sum(rows) * scale, out_ref.shape)

    if n_rows % tm == 0:
        # Every tile is full: no masking work at all.
        _write(ent)
    else:
        is_last = i == pl.num_programs(0) - 1

        @pl.when(jnp.logical_not(is_last))
        def _():
            _write(ent)

        @pl.when(is_last)
        def _():
            # Ragged last tile: garbage (out-of-bounds) rows may be NaN/Inf, but the
            # select zeroes them out per row before the reduction, so nothing leaks.
            row_ids = i * tm + jax.lax.broadcasted_iota(jnp.int32, (tm, 1), 0)
            _write(jnp.where(row_ids < n_rows, ent, 0.0))


def _auto_row_tile(n_rows, n_cols, in_itemsize):
    """Chip-aware row-tile size + scoped VMEM limit."""
    try:
        vmem_cap = pltpu.get_tpu_info().vmem_capacity_bytes     # 128MiB v5e/v6e, 64MiB v7x
    except Exception:
        vmem_cap = 64 << 20                                     # conservative fallback
    vmem_limit = int(min(vmem_cap // 2, 64 << 20))              # 64MiB v5e/v6e, 32MiB v7x

    in_row = max(n_cols * in_itemsize, 1)
    f32_row = max(n_cols * 4, 1)
    # ~4 MiB of input per grid step (amortizes ~0.35us/step overhead and the XLU
    # reduction passes), capped so the double-buffered input plus a handful of
    # [tm, C] f32 intermediates stay well inside the scoped VMEM limit.
    tm = (4 << 20) // in_row
    tm = min(tm, (vmem_limit // 10) // f32_row)
    tm = max(8, (tm // 8) * 8)

    if tm >= n_rows:
        if n_rows >= 1024:
            # Keep >=2 row tiles so the "parallel" axis can shard across both TCs (v7x).
            tm = _round_up(pl.cdiv(n_rows, 2), 8)
        else:
            tm = n_rows                                         # single full-batch tile
    return tm, vmem_limit


def conditional_entropy_loss(x, *, row_tile=None):
    """JAX/Pallas equivalent of ConditionalEntropyLoss.forward for [B, C] logits."""
    if x.ndim != 2:
        # TODO(synk): rank>2 inputs (softmax over dim=1 with trailing dims) not wired
        # up; MAPU feeds [batch, num_classes] logits to this loss.
        raise ValueError("conditional_entropy_loss expects [batch, classes] logits")

    B, C = x.shape
    tm, vmem_limit = _auto_row_tile(B, C, x.dtype.itemsize)
    if row_tile is not None:                                    # test/tuning override
        tm = min(_round_up(row_tile, 8), _round_up(B, 8))
        if tm >= B:
            tm = B

    n_tiles = pl.cdiv(B, tm)
    kernel = functools.partial(_cond_entropy_kernel, n_rows=B, tm=tm)

    partials = pl.pallas_call(
        kernel,
        out_shape=jax.ShapeDtypeStruct((n_tiles, 1, 128), jnp.float32),
        grid_spec=pltpu.PrefetchScalarGridSpec(
            num_scalar_prefetch=0,
            grid=(n_tiles,),
            in_specs=[
                # Native-dtype logits row tile; ragged last block handled in-kernel.
                pl.BlockSpec((tm, C), lambda i: (i, 0)),
            ],
            out_specs=pl.BlockSpec((1, 1, 128), lambda i: (i, 0, 0)),
        ),
        compiler_params=pltpu.CompilerParams(
            dimension_semantics=("parallel",),                  # independent row tiles
            vmem_limit_bytes=vmem_limit,
        ),
    )(x)

    # Tiny final reduction over per-tile partials (scale already folded in-kernel).
    return jnp.sum(partials[:, 0, 0])


def _numpy_reference(x):
    """Straight port of the PyTorch forward for verification."""
    x = np.asarray(x, dtype=np.float32)
    shifted = x - x.max(axis=1, keepdims=True)
    e = np.exp(shifted)
    z = e.sum(axis=1, keepdims=True)
    p = e / z
    logp = shifted - np.log(z)
    b = (p * logp).sum(axis=1)
    return float(-1.0 * b.mean(axis=0))


if __name__ == "__main__":
    key = jax.random.PRNGKey(0)
    k1, k2 = jax.random.split(key)

    # Case 1: typical small classifier logits (B=6, C=10); single full-batch tile,
    # block shape equals array shape (no padding anywhere).
    x1 = jax.random.normal(k1, (6, 10), dtype=jnp.float32) * 3.0
    loss1 = jax.block_until_ready(conditional_entropy_loss(x1))
    np.testing.assert_allclose(float(loss1), _numpy_reference(np.asarray(x1)),
                               rtol=1e-4, atol=1e-6)

    # Case 2: larger batch + non-128-multiple class count, auto tile selection.
    x2 = jax.random.normal(k2, (300, 257), dtype=jnp.float32)
    loss2 = jax.block_until_ready(conditional_entropy_loss(x2))
    ref2 = _numpy_reference(np.asarray(x2))
    np.testing.assert_allclose(float(loss2), ref2, rtol=1e-4, atol=1e-6)

    # Case 3: forced small tile -> ragged last block exercises the pl.when row mask
    # (44 valid rows out of 128 in the final tile, no wrapper-side padding).
    loss3 = jax.block_until_ready(conditional_entropy_loss(x2, row_tile=128))
    np.testing.assert_allclose(float(loss3), ref2, rtol=1e-4, atol=1e-6)

    # Case 4: bf16 logits streamed natively (no wrapper cast); math stays f32 in-kernel.
    x4 = x2.astype(jnp.bfloat16)
    loss4 = jax.block_until_ready(conditional_entropy_loss(x4, row_tile=128))
    ref4 = _numpy_reference(np.asarray(x4.astype(jnp.float32)))
    np.testing.assert_allclose(float(loss4), ref4, rtol=1e-4, atol=1e-6)

    print("KERNEL_OK")
</pallas_src>

<mosaic_0001>
module attributes {stable_mosaic.version = 11 : i64} {
  func.func @_cond_entropy_kernel(%arg0: i32, %arg1: memref<6x10xf32, #tpu.memory_space<vmem>>, %arg2: memref<1x1x128xf32, #tpu.memory_space<vmem>>) attributes {dimension_semantics = [#tpu.dimension_semantics<parallel>], iteration_bounds = array<i64: 1>, scalar_prefetch = 0 : i64, scratch_operands = 0 : i64, tpu.core_type = #tpu.core_type<tc>, window_params = [{transform_indices = @transform_0, window_bounds = array<i64: 6, 10>}, {transform_indices = @transform_1, window_bounds = array<i64: 1, 1, 128>}]} {
    %c0 = arith.constant 0 : index
    %c0_0 = arith.constant 0 : index
    %0 = vector.load %arg1[%c0, %c0_0] : memref<6x10xf32, #tpu.memory_space<vmem>>, vector<6x10xf32>
    %cst = arith.constant dense<0xFF800000> : vector<6xf32>
    %1 = vector.multi_reduction <maximumf>, %0, %cst [1] : vector<6x10xf32> to vector<6xf32>
    %2 = vector.shape_cast %1 : vector<6xf32> to vector<6x1xf32>
    %3 = vector.broadcast %2 : vector<6x1xf32> to vector<6x10xf32>
    %4 = arith.subf %0, %3 : vector<6x10xf32>
    %5 = math.exp %4 : vector<6x10xf32>
    %cst_1 = arith.constant dense<0.000000e+00> : vector<6xf32>
    %6 = vector.multi_reduction <add>, %5, %cst_1 [1] : vector<6x10xf32> to vector<6xf32>
    %7 = vector.shape_cast %6 : vector<6xf32> to vector<6x1xf32>
    %8 = tpu.reciprocal %7 {approx = true} : vector<6x1xf32> -> vector<6x1xf32>
    %9 = arith.mulf %7, %8 : vector<6x1xf32>
    %cst_2 = arith.constant 2.000000e+00 : f32
    %10 = vector.broadcast %cst_2 : f32 to vector<6x1xf32>
    %11 = arith.subf %10, %9 : vector<6x1xf32>
    %12 = arith.mulf %8, %11 : vector<6x1xf32>
    %13 = arith.mulf %5, %4 : vector<6x10xf32>
    %cst_3 = arith.constant dense<0.000000e+00> : vector<6xf32>
    %14 = vector.multi_reduction <add>, %13, %cst_3 [1] : vector<6x10xf32> to vector<6xf32>
    %15 = vector.shape_cast %14 : vector<6xf32> to vector<6x1xf32>
    %16 = arith.mulf %15, %12 : vector<6x1xf32>
    %17 = math.log %7 : vector<6x1xf32>
    %18 = arith.subf %16, %17 : vector<6x1xf32>
    %19 = vector.shape_cast %18 : vector<6x1xf32> to vector<1x6x1xf32>
    %cst_4 = arith.constant dense<0.000000e+00> : vector<1xf32>
    %20 = vector.multi_reduction <add>, %19, %cst_4 [1, 2] : vector<1x6x1xf32> to vector<1xf32>
    %21 = vector.shape_cast %20 : vector<1xf32> to vector<1x1x1xf32>
    %22 = vector.extract %21[0, 0, 0] : f32 from vector<1x1x1xf32>
    %cst_5 = arith.constant -0.166666672 : f32
    %23 = arith.mulf %22, %cst_5 : f32
    %24 = vector.broadcast %23 : f32 to vector<1x1x128xf32>
    %c0_6 = arith.constant 0 : index
    %c0_7 = arith.constant 0 : index
    %c0_8 = arith.constant 0 : index
    %25 = vector.load %arg2[%c0_6, %c0_7, %c0_8] : memref<1x1x128xf32, #tpu.memory_space<vmem>>, vector<1x1x128xf32>
    tpu.vector_store %arg2[%c0_6, %c0_7, %c0_8], %24 {strides = array<i32>} : memref<1x1x128xf32, #tpu.memory_space<vmem>>, vector<1x1x128xf32>,
    return
  }
  func.func @transform_0(%arg0: i32) -> (i32, i32) {
    %c0_i32 = arith.constant 0 : i32
    %c0_i32_0 = arith.constant 0 : i32
    return %arg0, %c0_i32 : i32, i32
  }
  func.func @transform_1(%arg0: i32) -> (i32, i32, i32) {
    %c0_i32 = arith.constant 0 : i32
    %c0_i32_0 = arith.constant 0 : i32
    %c0_i32_1 = arith.constant 0 : i32
    return %arg0, %c0_i32, %c0_i32_0 : i32, i32, i32
  }
}

</mosaic_0001>

<llo_original>
// kernel: tpu_custom_call.1
$region0: #{tpu_custom_call.1}
  #allocation0 [shape = 'u32[]', space=smem, size = 0x4, offset = 0x4, fixed_abs, tag = 'smem constant byte address 0x4 - core index']
  #allocation1 [shape = 'u32[72,128]{1,0:T(1,128)}', space=vmem, size = 0x9000, scoped, tag = 'internal scratch']
  %s0 = inlined_call_operand.hbm [shape: f32[6,10], index: 0, kind: input, shape index: {}]
  %s1 = inlined_call_operand.hbm [shape: f32[1,1,128], index: 1, kind: output, shape index: {}]
  %s2 = sld [smem:[#allocation0]]
  $region18: #{tpu_custom_call.1} parent=0
    _
  %s4 = ssub.s32 1, %s2
  %s5 = scalar_select 0, %s4, %s2
  $region1: #{tpu_custom_call.1} parent=0
    #allocation2 [shape = 'u8[4096]{0}', space=vmem, size = 0x1000, scoped, tag = 'input window, operand 0, single buffered']
    #allocation3 [shape = 's32[1]{0}', space=sflag, size = 0x4, scoped, tag = 'scoped memory for tpu_custom_call.1']
    #allocation4 [shape = 's32[1]{0}', space=sflag, size = 0x4, scoped, tag = 'scoped memory for tpu_custom_call.1']
    #allocation5 [shape = 'u8[512]{0}', space=vmem, size = 0x400, scoped, tag = 'output window, operand 0, single buffered']
    %6 = vsyncpa [#allocation3], 0
    %7 = vsyncpa [#allocation4], 0
    // Predicated region
    $region2: #{tpu_custom_call.1} parent=1 // pred_check
      _
    $region3: #{tpu_custom_call.1} parent=1 // pred_check_branch
      %9 = sbr.rel (0) target = $region5
    $region4: #{tpu_custom_call.1} parent=1 // pred_region
      %11 = vsyncadd [#allocation3], 0
      %s13 = sshll.u32 %s0, 4
      %s14 = int_to_ptr.hbm [resolvable:$true] %s13
      %s15 = sshll.u32 [#allocation2], 4
      %s16 = int_to_ptr.vmem [resolvable:$true] %s15
      %18 = dma.hbm_to_vmem [thread:$0]  %s14, 128, %s16, [#allocation3]
    $region5: #{tpu_custom_call.1} parent=1 // pred_fallthru
      _
    // Predicated region
    $region6: #{tpu_custom_call.1} parent=1 // pred_check
      _
    $region7: #{tpu_custom_call.1} parent=1 // pred_check_branch
      %20 = sbr.rel (0) target = $region9
    $region8: #{tpu_custom_call.1} parent=1 // pred_region
      %22 = dma.done [#allocation3], 128
    $region9: #{tpu_custom_call.1} parent=1 // pred_fallthru
      _
    %v23 = vld [vmem:[#allocation2] sm:$0x3f]
    %vm24 = vcmask 78848
    %v25 = vsel %vm24, %v23, -inf
    %26 = vmax.xlane.f32.xlu0 %v25
    %v27 = vpop.xlane.xlu0 %26
    %v28 = vsub.f32 %v23, %v27
    %v29 = vmul.f32 %v28, 1.442695
    %v30 = vpow.pop %v29
    %v31 = vsel %vm24, %v30, 0.0
    %32 = vadd.xlane.f32.xlu0 %v31
    %v33 = vpop.xlane.xlu0 %32
    %v34 = vrcp.pop %v33
    %v35 = vmul.f32 %v33, %v34
    %v36 = vsub.f32 2.0, %v35
    %v37 = vmul.f32 %v34, %v36
    %v38 = vmul.f32 %v30, %v28
    %v39 = vsel %vm24, %v38, 0.0
    %40 = vadd.xlane.f32.xlu0 %v39
    %v41 = vpop.xlane.xlu0 %40
    %v42 = vmul.f32 %v41, %v37
    %v43 = vlog2.pop %v33
    %v44 = vmul.f32 %v43, 0.6931472
    %v45 = vsub.f32 %v42, %v44
    %vm46 = vcmask 5120
    %v47 = vsel %vm46, %v45, 0.0
    %48 = vadd.xlane.f32.xlu0 %v47
    %v49 = vpop.xlane.xlu0 %48
    %v50 = vrot.slane %v49, 4
    %v51 = vadd.f32 %v49, %v50
    %v52 = vrot.slane %v51, 2
    %v53 = vadd.f32 %v51, %v52
    %v54 = vrot.slane %v53, 1
    %v55 = vadd.f32 %v53, %v54
    %s56 = vtos %v55
    %s57 = smul.f32 %s56, -0.16666667
    %v58 = vstv %s57
    %59 = vst [vmem:[#allocation5] sm:$0x1] %v58
    // Predicated region
    $region10: #{tpu_custom_call.1} parent=1 // pred_check
      _
    $region11: #{tpu_custom_call.1} parent=1 // pred_check_branch
      %61 = sbr.rel (0) target = $region13
    $region12: #{tpu_custom_call.1} parent=1 // pred_region
      %63 = vsyncadd [#allocation4], 0
      %s65 = sshll.u32 [#allocation5], 4
      %s66 = int_to_ptr.vmem [resolvable:$true] %s65
      %s67 = sshll.u32 %s1, 4
      %s68 = int_to_ptr.hbm [resolvable:$true] %s67
      %70 = dma.vmem_to_hbm [thread:$0]  %s66, 16, %s68, [#allocation4]
    $region13: #{tpu_custom_call.1} parent=1 // pred_fallthru
      _
    // Predicated region
    $region14: #{tpu_custom_call.1} parent=1 // pred_check
      _
    $region15: #{tpu_custom_call.1} parent=1 // pred_check_branch
      %72 = sbr.rel (0) target = $region17
    $region16: #{tpu_custom_call.1} parent=1 // pred_region
      %74 = dma.done [#allocation4], 16
    $region17: #{tpu_custom_call.1} parent=1 // pred_fallthru
      _
    %75 = vsyncpa [#allocation3], 1
    %76 = vsyncpa [#allocation4], 1

</llo_original>
